<compile_context>
chip_gen: v7x
topology: tpu7x:2x2x1
jax: 0.10.0
libtpu: 0.0.40
codegen_flags: <defaults>
</compile_context>

<pallas_src>
import jax
import jax.numpy as jnp
import numpy as np
from jax.experimental import pallas as pl
from jax.experimental.pallas import tpu as pltpu


def _cb_loss_kernel(logits_ref, labels_ref, wcls_ref, out_ref):
    """One batch tile: weighted, numerically-stable sigmoid BCE partial sum."""
    x = logits_ref[...].astype(jnp.float32)        # (TB, C)  f32 math
    lab = labels_ref[...]                          # (TB, 1)  int32 (-1 => pad row)
    wc = wcls_ref[...]                             # (1, C)   f32 class weights
    tb, c = x.shape

    # one-hot(labels, C) on the VPU; padded rows (label == -1) -> all-zero row.
    col = jax.lax.broadcasted_iota(jnp.int32, (tb, c), 1)
    one_hot = (col == lab).astype(jnp.float32)                   # (TB, C)

    # per-example weight = class_weight[label]  (exactly 0 for padded rows)
    w_ex = jnp.sum(wc * one_hot, axis=1, keepdims=True)          # (TB, 1)

    # numerically-stable BCE with logits, ONE softplus per element:
    #   z * softplus(-x) + (1 - z) * softplus(x) == softplus(x) - z * x
    bce = jax.nn.softplus(x) - one_hot * x                       # (TB, C)

    # factored reduction: row sums over classes (XLU), then per-row weight.
    row_sum = jnp.sum(bce, axis=1, keepdims=True)                # (TB, 1)
    partial = jnp.sum(w_ex * row_sum)                            # scalar

    # lane-dense per-tile partial-sum block (1, 8, 128), replicate the scalar.
    out_ref[...] = jnp.zeros(out_ref.shape, jnp.float32) + partial


def _pick_tile_b(batch, n_classes, itemsize):
    """Rows per tile: ~2 MiB of logits per tile, multiple of 8, <= padded batch."""
    target_bytes = 2 * 1024 * 1024
    rows = target_bytes // max(1, n_classes * itemsize)
    rows = max(8, (rows // 8) * 8)
    rows = min(rows, 2048)
    batch_pad8 = ((batch + 7) // 8) * 8
    return max(8, min(rows, batch_pad8))


def cb_loss(logits, labels, samples_per_cls, no_of_classes,
            loss_type="sigmoid", beta=0.9999, gamma=1.0, tile_b=None):
    """Class-balanced loss (sigmoid BCE-with-logits branch) via Pallas.

    Note: `gamma` is accepted but unused in the 'sigmoid' branch, matching the
    PyTorch module's behavior (no focal modulation in that branch).
    """
    if loss_type != "sigmoid":
        # TODO(synk): 'focal' and 'softmax' branches not implemented in-kernel.
        raise NotImplementedError("only loss_type='sigmoid' (the default) is implemented")

    B, C = logits.shape
    assert C == no_of_classes

    # class-balanced weights (parameter setup, plain numpy glue)
    effective_num = 1.0 - np.power(beta, np.asarray(samples_per_cls, dtype=np.float64))
    weights = (1.0 - beta) / effective_num
    weights = weights / weights.sum() * no_of_classes
    wcls = jnp.asarray(weights, dtype=jnp.float32).reshape(1, C)

    # Keep bf16/f32 logits as-is (DMA fewer bytes for bf16); upcast in-kernel.
    if not jnp.issubdtype(logits.dtype, jnp.floating):
        logits = logits.astype(jnp.float32)
    labels2d = labels.astype(jnp.int32).reshape(B, 1)

    itemsize = jnp.dtype(logits.dtype).itemsize
    if tile_b is None:
        tile_b = _pick_tile_b(B, C, itemsize)
    else:
        tile_b = max(8, ((int(tile_b) + 7) // 8) * 8)

    num_tiles = -(-B // tile_b)
    B_pad = num_tiles * tile_b
    if B_pad != B:
        # padded rows: logits = 0, label = -1  =>  one-hot row is all zeros
        # =>  per-example weight is 0  =>  zero contribution to the loss sum.
        logits = jnp.pad(logits, ((0, B_pad - B), (0, 0)))
        labels2d = jnp.pad(labels2d, ((0, B_pad - B), (0, 0)), constant_values=-1)

    # TODO(synk): for genuinely tiny C (e.g. C=4) most of each 128-lane vreg is
    # idle; a lane-packing layout (several batch rows per vreg row) would help,
    # but is not needed for correctness.

    cost = pl.CostEstimate(
        flops=8 * B_pad * C,
        transcendentals=2 * B_pad * C,  # exp + log1p inside the single softplus
        bytes_accessed=(B_pad * C * itemsize            # logits
                        + B_pad * 4                     # labels
                        + C * 4                         # class weights
                        + num_tiles * 8 * 128 * 4),     # partial sums
    )

    partials = pl.pallas_call(
        _cb_loss_kernel,
        out_shape=jax.ShapeDtypeStruct((num_tiles, 8, 128), jnp.float32),
        grid_spec=pltpu.PrefetchScalarGridSpec(
            num_scalar_prefetch=0,
            grid=(num_tiles,),
            in_specs=[
                pl.BlockSpec((tile_b, C), lambda i: (i, 0)),   # logits tile
                pl.BlockSpec((tile_b, 1), lambda i: (i, 0)),   # labels tile
                pl.BlockSpec((1, C), lambda i: (0, 0)),        # class weights (resident)
            ],
            out_specs=pl.BlockSpec((1, 8, 128), lambda i: (i, 0, 0)),
        ),
        compiler_params=pltpu.CompilerParams(
            dimension_semantics=("parallel",),   # independent tiles -> megacore on v7x
        ),
        cost_estimate=cost,
    )(logits, labels2d, wcls)

    # tiny final reduction + 'mean' normalization over the ORIGINAL B*C elements
    return jnp.sum(partials[:, 0, 0]) / jnp.float32(B * C)


def _reference_cb_loss(logits, labels, samples_per_cls, no_of_classes, beta=0.9999):
    """Pure-JAX reference mirroring the PyTorch module (sigmoid branch)."""
    effective_num = 1.0 - np.power(beta, np.asarray(samples_per_cls, dtype=np.float64))
    weights = (1.0 - beta) / effective_num
    weights = weights / weights.sum() * no_of_classes
    wcls = jnp.asarray(weights, dtype=jnp.float32)

    one_hot = jax.nn.one_hot(labels, no_of_classes, dtype=jnp.float32)
    w = (wcls[None, :] * one_hot).sum(axis=1, keepdims=True)
    w = jnp.broadcast_to(w, one_hot.shape)
    x = logits.astype(jnp.float32)
    bce = one_hot * jax.nn.softplus(-x) + (1.0 - one_hot) * jax.nn.softplus(x)
    return jnp.mean(w * bce)


if __name__ == "__main__":
    key = jax.random.PRNGKey(0)
    k1, k2, k3, k4 = jax.random.split(key, 4)

    # --- test 1: module-sized demo (batch=8, no_of_classes=4, f32) ---
    B, C = 8, 4
    samples_per_cls = [100, 50, 20, 5]
    beta, gamma = 0.9999, 1.0

    logits = jax.random.normal(k1, (B, C), dtype=jnp.float32)
    labels = jax.random.randint(k2, (B,), 0, C, dtype=jnp.int32)

    loss = cb_loss(logits, labels, samples_per_cls, C,
                   loss_type="sigmoid", beta=beta, gamma=gamma)
    loss = jax.block_until_ready(loss)
    ref = jax.block_until_ready(
        _reference_cb_loss(logits, labels, samples_per_cls, C, beta=beta))
    assert np.allclose(np.asarray(loss), np.asarray(ref), rtol=1e-5, atol=1e-6), (loss, ref)

    # --- test 2: exercise tiling, batch padding, and the bf16 DMA path ---
    B2, C2 = 300, 128
    spc2 = list(np.linspace(1000, 10, C2))
    logits2 = jax.random.normal(k3, (B2, C2), dtype=jnp.bfloat16)
    labels2 = jax.random.randint(k4, (B2,), 0, C2, dtype=jnp.int32)

    loss2 = cb_loss(logits2, labels2, spc2, C2, beta=beta, tile_b=128)  # 3 tiles + pad
    loss2 = jax.block_until_ready(loss2)
    ref2 = jax.block_until_ready(
        _reference_cb_loss(logits2, labels2, spc2, C2, beta=beta))
    assert np.allclose(np.asarray(loss2), np.asarray(ref2), rtol=1e-4, atol=1e-5), (loss2, ref2)

    print("KERNEL_OK")
</pallas_src>

<mosaic_0001>
module attributes {stable_mosaic.version = 11 : i64} {
  func.func @_cb_loss_kernel(%arg0: i32, %arg1: memref<8x4xf32, #tpu.memory_space<vmem>>, %arg2: memref<8x1xi32, #tpu.memory_space<vmem>>, %arg3: memref<1x4xf32, #tpu.memory_space<vmem>>, %arg4: memref<1x8x128xf32, #tpu.memory_space<vmem>>) attributes {dimension_semantics = [#tpu.dimension_semantics<parallel>], iteration_bounds = array<i64: 1>, scalar_prefetch = 0 : i64, scratch_operands = 0 : i64, tpu.core_type = #tpu.core_type<tc>, window_params = [{transform_indices = @transform_0, window_bounds = array<i64: 8, 4>}, {transform_indices = @transform_1, window_bounds = array<i64: 8, 1>}, {pipeline_mode = #tpu.pipeline_mode<synchronous>, transform_indices = @transform_2, window_bounds = array<i64: 1, 4>}, {transform_indices = @transform_3, window_bounds = array<i64: 1, 8, 128>}]} {
    %c0 = arith.constant 0 : index
    %c0_0 = arith.constant 0 : index
    %0 = vector.load %arg1[%c0, %c0_0] : memref<8x4xf32, #tpu.memory_space<vmem>>, vector<8x4xf32>
    %c0_1 = arith.constant 0 : index
    %c0_2 = arith.constant 0 : index
    %1 = vector.load %arg2[%c0_1, %c0_2] : memref<8x1xi32, #tpu.memory_space<vmem>>, vector<8x1xi32>
    %c0_3 = arith.constant 0 : index
    %c0_4 = arith.constant 0 : index
    %2 = vector.load %arg3[%c0_3, %c0_4] : memref<1x4xf32, #tpu.memory_space<vmem>>, vector<1x4xf32>
    %3 = tpu.iota {dimensions = array<i32: 1>} : vector<8x4xi32>
    %4 = vector.broadcast %1 : vector<8x1xi32> to vector<8x4xi32>
    %5 = arith.cmpi eq, %3, %4 : vector<8x4xi32>
    %6 = arith.extui %5 : vector<8x4xi1> to vector<8x4xi32>
    %7 = arith.sitofp %6 : vector<8x4xi32> to vector<8x4xf32>
    %8 = vector.broadcast %2 : vector<1x4xf32> to vector<8x4xf32>
    %9 = arith.mulf %8, %7 : vector<8x4xf32>
    %cst = arith.constant dense<0.000000e+00> : vector<8xf32>
    %10 = vector.multi_reduction <add>, %9, %cst [1] : vector<8x4xf32> to vector<8xf32>
    %11 = vector.shape_cast %10 : vector<8xf32> to vector<8x1xf32>
    %cst_5 = arith.constant 0.000000e+00 : f32
    %12 = vector.broadcast %cst_5 : f32 to vector<8x4xf32>
    %13 = arith.maximumf %0, %12 : vector<8x4xf32>
    %14 = vector.broadcast %cst_5 : f32 to vector<8x4xf32>
    %15 = arith.subf %0, %14 : vector<8x4xf32>
    %16 = arith.cmpf one, %15, %15 : vector<8x4xf32>
    %17 = vector.broadcast %cst_5 : f32 to vector<8x4xf32>
    %18 = arith.addf %0, %17 : vector<8x4xf32>
    %19 = math.absf %15 : vector<8x4xf32>
    %cst_6 = arith.constant 0.000000e+00 : f32
    %20 = vector.broadcast %cst_6 : f32 to vector<8x4xf32>
    %21 = arith.subf %20, %19 : vector<8x4xf32>
    %22 = math.exp %21 : vector<8x4xf32>
    %23 = math.log1p %22 : vector<8x4xf32>
    %24 = arith.addf %13, %23 : vector<8x4xf32>
    %25 = arith.select %16, %18, %24 : vector<8x4xi1>, vector<8x4xf32>
    %26 = arith.mulf %7, %0 : vector<8x4xf32>
    %27 = arith.subf %25, %26 : vector<8x4xf32>
    %cst_7 = arith.constant dense<0.000000e+00> : vector<8xf32>
    %28 = vector.multi_reduction <add>, %27, %cst_7 [1] : vector<8x4xf32> to vector<8xf32>
    %29 = vector.shape_cast %28 : vector<8xf32> to vector<8x1xf32>
    %30 = arith.mulf %11, %29 : vector<8x1xf32>
    %31 = vector.shape_cast %30 : vector<8x1xf32> to vector<1x8x1xf32>
    %cst_8 = arith.constant dense<0.000000e+00> : vector<1xf32>
    %32 = vector.multi_reduction <add>, %31, %cst_8 [1, 2] : vector<1x8x1xf32> to vector<1xf32>
    %33 = vector.shape_cast %32 : vector<1xf32> to vector<1x1x1xf32>
    %34 = vector.extract %33[0, 0, 0] : f32 from vector<1x1x1xf32>
    %cst_9 = arith.constant 0.000000e+00 : f32
    %35 = vector.broadcast %cst_9 : f32 to vector<1x8x128xf32>
    %36 = vector.broadcast %34 : f32 to vector<1x8x128xf32>
    %37 = arith.addf %35, %36 : vector<1x8x128xf32>
    %c0_10 = arith.constant 0 : index
    %c0_11 = arith.constant 0 : index
    %c0_12 = arith.constant 0 : index
    %38 = vector.load %arg4[%c0_10, %c0_11, %c0_12] : memref<1x8x128xf32, #tpu.memory_space<vmem>>, vector<1x8x128xf32>
    tpu.vector_store %arg4[%c0_10, %c0_11, %c0_12], %37 {strides = array<i32>} : memref<1x8x128xf32, #tpu.memory_space<vmem>>, vector<1x8x128xf32>,
    return
  }
  func.func @transform_0(%arg0: i32) -> (i32, i32) {
    %c0_i32 = arith.constant 0 : i32
    %c0_i32_0 = arith.constant 0 : i32
    return %arg0, %c0_i32 : i32, i32
  }
  func.func @transform_1(%arg0: i32) -> (i32, i32) {
    %c0_i32 = arith.constant 0 : i32
    %c0_i32_0 = arith.constant 0 : i32
    return %arg0, %c0_i32 : i32, i32
  }
  func.func @transform_2(%arg0: i32) -> (i32, i32) {
    %c0_i32 = arith.constant 0 : i32
    %c0_i32_0 = arith.constant 0 : i32
    %c0_i32_1 = arith.constant 0 : i32
    return %c0_i32, %c0_i32_0 : i32, i32
  }
  func.func @transform_3(%arg0: i32) -> (i32, i32, i32) {
    %c0_i32 = arith.constant 0 : i32
    %c0_i32_0 = arith.constant 0 : i32
    %c0_i32_1 = arith.constant 0 : i32
    return %arg0, %c0_i32, %c0_i32_0 : i32, i32, i32
  }
}

</mosaic_0001>

<llo_original>
// kernel: tpu_custom_call.1
$region0: #{tpu_custom_call.1}
  #allocation0 [shape = 'u32[]', space=smem, size = 0x4, offset = 0x4, fixed_abs, tag = 'smem constant byte address 0x4 - core index']
  #allocation1 [shape = 'u32[144,128]{1,0:T(1,128)}', space=vmem, size = 0x12000, scoped, tag = 'internal scratch']
  %s0 = inlined_call_operand.vmem [shape: f32[8,4], index: 0, kind: input, shape index: {}]
  %s1 = inlined_call_operand.vmem [shape: s32[8,1], index: 1, kind: input, shape index: {}]
  %s2 = inlined_call_operand.vmem [shape: f32[1,4], index: 2, kind: input, shape index: {}]
  %s3 = inlined_call_operand.hbm [shape: f32[1,8,128], index: 3, kind: output, shape index: {}]
  %s4 = sld [smem:[#allocation0]]
  $region22: #{tpu_custom_call.1} parent=0
    _
  %s6 = ssub.s32 1, %s4
  %s7 = scalar_select 0, %s6, %s4
  $region1: #{tpu_custom_call.1} parent=0
    #allocation2 [shape = 'u8[4096]{0}', space=vmem, size = 0x1000, scoped, tag = 'output window, operand 0, single buffered']
    #allocation3 [shape = 's32[1]{0}', space=sflag, size = 0x4, scoped, tag = 'scoped memory for tpu_custom_call.1']
    %8 = vsyncpa [#allocation3], 0
    // Predicated region
    $region2: #{tpu_custom_call.1} parent=1 // pred_check
      _
    $region3: #{tpu_custom_call.1} parent=1 // pred_check_branch
      %10 = sbr.rel (0) target = $region5
    $region4: #{tpu_custom_call.1} parent=1 // pred_region
      _
    $region5: #{tpu_custom_call.1} parent=1 // pred_fallthru
      _
    // Predicated region
    $region6: #{tpu_custom_call.1} parent=1 // pred_check
      _
    $region7: #{tpu_custom_call.1} parent=1 // pred_check_branch
      %12 = sbr.rel (0) target = $region9
    $region8: #{tpu_custom_call.1} parent=1 // pred_region
      _
    $region9: #{tpu_custom_call.1} parent=1 // pred_fallthru
      _
    // Predicated region
    $region10: #{tpu_custom_call.1} parent=1 // pred_check
      _
    $region11: #{tpu_custom_call.1} parent=1 // pred_check_branch
      %14 = sbr.rel (0) target = $region13
    $region12: #{tpu_custom_call.1} parent=1 // pred_region
      _
    $region13: #{tpu_custom_call.1} parent=1 // pred_fallthru
      _
    %v15 = vld [vmem:[%s0] sm:$0xff]
    %v16 = vld [vmem:[%s1] sm:$0xff]
    %v17 = vld [vmem:[%s2] sm:$0x1]
    %v18 = vlaneseq
    %v19 = vand.u32 %v18, 127
    %20 = vset.pattern.permute.xlu0 0
    %21 = vperm.xlu0 %20, %v16
    %v22 = vpop.permute.xlu0 %21
    %vm23 = vcmp.eq.s32.totalorder %v19, %v22
    %v24 = vsel %vm23, 1, 0
    %v25 = vcvt.s32.f32 %v24
    %v27 = vlaneseq
    %v28 = vshrl.u32 %v27, 7
    %v29 = vsub.s32 0, %v28
    %v30 = vrot.slane %v17, %v29
    %v32 = vmul.f32 %v30, %v25
    %vm33 = vcmask 31744
    %v34 = vsel %vm33, %v32, 0.0
    %35 = vadd.xlane.f32.xlu0 %v34
    %v36 = vpop.xlane.xlu0 %35
    %v37 = vmax.f32 %v15, 0.0
    %vm38 = vcmp.ne.f32.partialorder %v15, %v15
    %v39 = vadd.f32 %v15, 0.0
    %v40 = vand.u32 2147483647, %v15
    %v41 = vsub.f32 0.0, %v40
    %v42 = vmul.f32 %v41, 1.442695
    %v43 = vpow.pop %v42
    %v44 = vadd.f32 %v43, 1.0
    %v45 = vlog2.pop %v44
    %v46 = vmul.f32 %v45, 0.6931472
    %v47 = vmul.f32 -0.5, %v43
    %v48 = vadd.f32 %v47, 1.0
    %v49 = vmul.f32 %v48, %v43
    %v50 = vand.u32 2147483647, %v43
    %vm51 = vcmp.lt.f32.partialorder %v50, 0.0004427343
    %v52 = vsel %vm51, %v49, %v46
    %v53 = vadd.f32 %v37, %v52
    %v54 = vsel %vm38, %v39, %v53
    %v55 = vmul.f32 %v25, %v15
    %v56 = vsub.f32 %v54, %v55
    %v57 = vsel %vm33, %v56, 0.0
    %58 = vadd.xlane.f32.xlu0 %v57
    %v59 = vpop.xlane.xlu0 %58
    %v60 = vmul.f32 %v36, %v59
    %vm61 = vcmask 7168
    %v62 = vsel %vm61, %v60, 0.0
    %63 = vadd.xlane.f32.xlu0 %v62
    %v64 = vpop.xlane.xlu0 %63
    %v65 = vrot.slane %v64, 4
    %v66 = vadd.f32 %v64, %v65
    %v67 = vrot.slane %v66, 2
    %v68 = vadd.f32 %v66, %v67
    %v69 = vrot.slane %v68, 1
    %v70 = vadd.f32 %v68, %v69
    %s71 = vtos %v70
    %v72 = vstv %s71
    %v73 = vadd.f32 %v72, 0.0
    %74 = vst [vmem:[#allocation2] sm:$0xff] %v73
    // Predicated region
    $region14: #{tpu_custom_call.1} parent=1 // pred_check
      _
    $region15: #{tpu_custom_call.1} parent=1 // pred_check_branch
      %76 = sbr.rel (0) target = $region17
    $region16: #{tpu_custom_call.1} parent=1 // pred_region
      %s78 = ssub.s32 128, 128
      %79 = vsyncadd [#allocation3], %s78
      %s81 = sshll.u32 [#allocation2], 4
      %s82 = int_to_ptr.vmem [resolvable:$true] %s81
      %84 = dma.vmem_to_hbm [thread:$0]  %s82, 128, %s3, [#allocation3]
    $region17: #{tpu_custom_call.1} parent=1 // pred_fallthru
      _
    // Predicated region
    $region18: #{tpu_custom_call.1} parent=1 // pred_check
      _
    $region19: #{tpu_custom_call.1} parent=1 // pred_check_branch
      %86 = sbr.rel (0) target = $region21
    $region20: #{tpu_custom_call.1} parent=1 // pred_region
      %87 = dma.done [#allocation3], 128
    $region21: #{tpu_custom_call.1} parent=1 // pred_fallthru
      _
    %88 = vsyncpa [#allocation3], 1

</llo_original>
